<compile_context>
chip_gen: v7x
topology: tpu7x:2x2x1
jax: 0.10.0
libtpu: 0.0.40
codegen_flags: <defaults>
</compile_context>

<pallas_src>
import functools

import jax
import jax.numpy as jnp
from jax.experimental import pallas as pl
from jax.experimental.pallas import tpu as pltpu


def _round_up(x, m):
    return ((x + m - 1) // m) * m


def _triplet_kernel(a_ref, p_ref, n_ref, out_ref, *, margin, batch, tb):
    i = pl.program_id(0)

    a = a_ref[...].astype(jnp.float32)
    p = p_ref[...].astype(jnp.float32)
    n = n_ref[...].astype(jnp.float32)

    dp = a - p
    dn = a - n

    # Fused single cross-lane reduction; keepdims -> (tb, 1) 2-D layout.
    diff = jnp.sum(dp * dp - dn * dn, axis=-1, keepdims=True)
    hinge = jnp.maximum(diff + margin, 0.0)                       # (tb, 1)

    # Zero-out padded tail rows so the wrapper's sum / B is exact.
    row = i * tb + jax.lax.broadcasted_iota(jnp.int32, (tb, 1), 0)
    out_ref[...] = jnp.where(row < batch, hinge, 0.0)


def triple_contrastive_loss(anchor, positive, negative, margin=1.0,
                            tb=None, vmem_budget_bytes=32 << 20):
    """Pallas TPU implementation of TripleContrastiveLoss.forward."""
    B, D = anchor.shape
    assert positive.shape == (B, D) and negative.shape == (B, D)

    itemsize = jnp.dtype(anchor.dtype).itemsize
    # f32 min tile is (8, 128); sub-32-bit dtypes need 16 sublanes.
    granule = 8 if itemsize >= 4 else 16

    if tb is None:
        # 3 inputs, double-buffered by the BlockSpec pipeline.
        per_row = 3 * 2 * D * itemsize
        tb = max(granule, vmem_budget_bytes // max(per_row, 1))
        tb = min(tb, 1024, _round_up(B, granule))
        tb = max(granule, (tb // granule) * granule)
    assert tb % granule == 0, "tile must respect the dtype's min sublane tiling"

    grid = pl.cdiv(B, tb)
    B_pad = grid * tb
    if B_pad != B:
        pad = ((0, B_pad - B), (0, 0))
        anchor = jnp.pad(anchor, pad)
        positive = jnp.pad(positive, pad)
        negative = jnp.pad(negative, pad)

    kernel = functools.partial(
        _triplet_kernel, margin=float(margin), batch=B, tb=tb)

    row_spec = pl.BlockSpec((tb, D), lambda i: (i, 0))

    # 3 double-buffered input tiles + double-buffered output column + headroom.
    vmem_needed = 3 * 2 * tb * D * itemsize + 2 * tb * 4 + (2 << 20)
    vmem_limit = min(max(int(vmem_needed), 32 << 20), 48 << 20)  # safe on v7x (64 MiB)

    partial_rows = pl.pallas_call(
        kernel,
        out_shape=jax.ShapeDtypeStruct((B_pad, 1), jnp.float32),
        grid_spec=pltpu.PrefetchScalarGridSpec(
            num_scalar_prefetch=0,
            grid=(grid,),
            in_specs=[row_spec, row_spec, row_spec],
            out_specs=pl.BlockSpec((tb, 1), lambda i: (i, 0)),
        ),
        compiler_params=pltpu.CompilerParams(
            dimension_semantics=("parallel",),   # independent tiles -> megacore on v7x
            vmem_limit_bytes=vmem_limit,
        ),
        cost_estimate=pl.CostEstimate(
            flops=6 * B * D,
            transcendentals=0,
            bytes_accessed=3 * B_pad * D * itemsize + B_pad * 4,
        ),
    )(anchor, positive, negative)

    # Tiny epilogue (B floats) done in XLA; padded rows are already zero.
    return jnp.sum(partial_rows) / B


def _reference(anchor, positive, negative, margin=1.0):
    a = anchor.astype(jnp.float32)
    p = positive.astype(jnp.float32)
    n = negative.astype(jnp.float32)
    d_pos = jnp.sum((a - p) ** 2, axis=-1)
    d_neg = jnp.sum((a - n) ** 2, axis=-1)
    return jnp.mean(jnp.maximum(d_pos - d_neg + margin, 0.0))


if __name__ == "__main__":
    key = jax.random.PRNGKey(0)

    # Test 1: small f32 batch, single tile.
    k_a, k_p, k_n = jax.random.split(key, 3)
    B, D = 8, 32
    a = jax.random.normal(k_a, (B, D), dtype=jnp.float32)
    p = jax.random.normal(k_p, (B, D), dtype=jnp.float32)
    n = jax.random.normal(k_n, (B, D), dtype=jnp.float32)
    loss = jax.block_until_ready(triple_contrastive_loss(a, p, n, margin=1.0))
    ref = _reference(a, p, n, margin=1.0)
    assert jnp.allclose(loss, ref, rtol=1e-5, atol=1e-5), (loss, ref)

    # Test 2: ragged bf16 batch (exercises padding + masking + bf16 tiling).
    k_a, k_p, k_n = jax.random.split(jax.random.PRNGKey(1), 3)
    B, D = 37, 128
    a = jax.random.normal(k_a, (B, D), dtype=jnp.bfloat16)
    p = jax.random.normal(k_p, (B, D), dtype=jnp.bfloat16)
    n = jax.random.normal(k_n, (B, D), dtype=jnp.bfloat16)
    loss = jax.block_until_ready(triple_contrastive_loss(a, p, n, margin=1.0))
    ref = _reference(a, p, n, margin=1.0)
    assert jnp.allclose(loss, ref, rtol=2e-4, atol=1e-5), (loss, ref)

    # Test 3: multi-tile grid with an explicit tile size.
    k_a, k_p, k_n = jax.random.split(jax.random.PRNGKey(2), 3)
    B, D = 64, 32
    a = jax.random.normal(k_a, (B, D), dtype=jnp.float32)
    p = jax.random.normal(k_p, (B, D), dtype=jnp.float32)
    n = jax.random.normal(k_n, (B, D), dtype=jnp.float32)
    loss = jax.block_until_ready(
        triple_contrastive_loss(a, p, n, margin=0.5, tb=16))
    ref = _reference(a, p, n, margin=0.5)
    assert jnp.allclose(loss, ref, rtol=1e-5, atol=1e-5), (loss, ref)

    print("KERNEL_OK")
</pallas_src>

<mosaic_0001>
module attributes {stable_mosaic.version = 11 : i64} {
  func.func @_triplet_kernel(%arg0: i32, %arg1: memref<8x32xf32, #tpu.memory_space<vmem>>, %arg2: memref<8x32xf32, #tpu.memory_space<vmem>>, %arg3: memref<8x32xf32, #tpu.memory_space<vmem>>, %arg4: memref<8x1xf32, #tpu.memory_space<vmem>>) attributes {dimension_semantics = [#tpu.dimension_semantics<parallel>], iteration_bounds = array<i64: 1>, scalar_prefetch = 0 : i64, scratch_operands = 0 : i64, tpu.core_type = #tpu.core_type<tc>, window_params = [{transform_indices = @transform_0, window_bounds = array<i64: 8, 32>}, {transform_indices = @transform_1, window_bounds = array<i64: 8, 32>}, {transform_indices = @transform_2, window_bounds = array<i64: 8, 32>}, {transform_indices = @transform_3, window_bounds = array<i64: 8, 1>}]} {
    %c0 = arith.constant 0 : index
    %c0_0 = arith.constant 0 : index
    %0 = vector.load %arg1[%c0, %c0_0] : memref<8x32xf32, #tpu.memory_space<vmem>>, vector<8x32xf32>
    %c0_1 = arith.constant 0 : index
    %c0_2 = arith.constant 0 : index
    %1 = vector.load %arg2[%c0_1, %c0_2] : memref<8x32xf32, #tpu.memory_space<vmem>>, vector<8x32xf32>
    %c0_3 = arith.constant 0 : index
    %c0_4 = arith.constant 0 : index
    %2 = vector.load %arg3[%c0_3, %c0_4] : memref<8x32xf32, #tpu.memory_space<vmem>>, vector<8x32xf32>
    %3 = arith.subf %0, %1 : vector<8x32xf32>
    %4 = arith.subf %0, %2 : vector<8x32xf32>
    %5 = arith.mulf %3, %3 : vector<8x32xf32>
    %6 = arith.mulf %4, %4 : vector<8x32xf32>
    %7 = arith.subf %5, %6 : vector<8x32xf32>
    %cst = arith.constant dense<0.000000e+00> : vector<8xf32>
    %8 = vector.multi_reduction <add>, %7, %cst [1] : vector<8x32xf32> to vector<8xf32>
    %9 = vector.shape_cast %8 : vector<8xf32> to vector<8x1xf32>
    %cst_5 = arith.constant 1.000000e+00 : f32
    %10 = vector.broadcast %cst_5 : f32 to vector<8x1xf32>
    %11 = arith.addf %9, %10 : vector<8x1xf32>
    %cst_6 = arith.constant 0.000000e+00 : f32
    %12 = vector.broadcast %cst_6 : f32 to vector<8x1xf32>
    %13 = arith.maximumf %11, %12 : vector<8x1xf32>
    %c8_i32 = arith.constant 8 : i32
    %14 = arith.muli %arg0, %c8_i32 : i32
    %15 = tpu.iota {dimensions = array<i32: 0>} : vector<8x1xi32>
    %16 = vector.broadcast %14 : i32 to vector<8x1xi32>
    %17 = arith.addi %16, %15 : vector<8x1xi32>
    %c8_i32_7 = arith.constant 8 : i32
    %18 = vector.broadcast %c8_i32_7 : i32 to vector<8x1xi32>
    %19 = arith.cmpi slt, %17, %18 : vector<8x1xi32>
    %cst_8 = arith.constant 0.000000e+00 : f32
    %20 = vector.broadcast %cst_8 : f32 to vector<8x1xf32>
    %21 = arith.select %19, %13, %20 : vector<8x1xi1>, vector<8x1xf32>
    %c0_9 = arith.constant 0 : index
    %c0_10 = arith.constant 0 : index
    %22 = vector.load %arg4[%c0_9, %c0_10] : memref<8x1xf32, #tpu.memory_space<vmem>>, vector<8x1xf32>
    tpu.vector_store %arg4[%c0_9, %c0_10], %21 {strides = array<i32>} : memref<8x1xf32, #tpu.memory_space<vmem>>, vector<8x1xf32>,
    return
  }
  func.func @transform_0(%arg0: i32) -> (i32, i32) {
    %c0_i32 = arith.constant 0 : i32
    %c0_i32_0 = arith.constant 0 : i32
    return %arg0, %c0_i32 : i32, i32
  }
  func.func @transform_1(%arg0: i32) -> (i32, i32) {
    %c0_i32 = arith.constant 0 : i32
    %c0_i32_0 = arith.constant 0 : i32
    return %arg0, %c0_i32 : i32, i32
  }
  func.func @transform_2(%arg0: i32) -> (i32, i32) {
    %c0_i32 = arith.constant 0 : i32
    %c0_i32_0 = arith.constant 0 : i32
    return %arg0, %c0_i32 : i32, i32
  }
  func.func @transform_3(%arg0: i32) -> (i32, i32) {
    %c0_i32 = arith.constant 0 : i32
    %c0_i32_0 = arith.constant 0 : i32
    return %arg0, %c0_i32 : i32, i32
  }
}

</mosaic_0001>

<llo_original>
// kernel: tpu_custom_call.1
$region0: #{tpu_custom_call.1}
  #allocation0 [shape = 'u32[]', space=smem, size = 0x4, offset = 0x4, fixed_abs, tag = 'smem constant byte address 0x4 - core index']
  #allocation1 [shape = 'u32[144,128]{1,0:T(1,128)}', space=vmem, size = 0x12000, scoped, tag = 'internal scratch']
  %s0 = inlined_call_operand.hbm [shape: f32[8,32], index: 0, kind: input, shape index: {}]
  %s1 = inlined_call_operand.hbm [shape: f32[8,32], index: 1, kind: input, shape index: {}]
  %s2 = inlined_call_operand.hbm [shape: f32[8,32], index: 2, kind: input, shape index: {}]
  %s3 = inlined_call_operand.vmem [shape: f32[8,1], index: 3, kind: output, shape index: {}]
  %s4 = sld [smem:[#allocation0]]
  $region34: #{tpu_custom_call.1} parent=0
    _
  %s6 = ssub.s32 1, %s4
  %s7 = scalar_select 0, %s6, %s4
  $region1: #{tpu_custom_call.1} parent=0
    #allocation2 [shape = 'u8[4096]{0}', space=vmem, size = 0x1000, scoped, tag = 'input window, operand 0, single buffered']
    #allocation3 [shape = 's32[1]{0}', space=sflag, size = 0x4, scoped, tag = 'scoped memory for tpu_custom_call.1']
    #allocation4 [shape = 'u8[4096]{0}', space=vmem, size = 0x1000, scoped, tag = 'input window, operand 1, single buffered']
    #allocation5 [shape = 's32[1]{0}', space=sflag, size = 0x4, scoped, tag = 'scoped memory for tpu_custom_call.1']
    #allocation6 [shape = 'u8[4096]{0}', space=vmem, size = 0x1000, scoped, tag = 'input window, operand 2, single buffered']
    %8 = vsyncpa [#allocation3], 0
    %9 = vsyncpa [#allocation5], 0
    // Predicated region
    $region2: #{tpu_custom_call.1} parent=1 // pred_check
      _
    $region3: #{tpu_custom_call.1} parent=1 // pred_check_branch
      %11 = sbr.rel (0) target = $region5
    $region4: #{tpu_custom_call.1} parent=1 // pred_region
      %s13 = ssub.s32 128, 128
      %14 = vsyncadd [#allocation3], %s13
      %s16 = sshll.u32 [#allocation2], 4
      %s17 = int_to_ptr.vmem [resolvable:$true] %s16
      %19 = dma.hbm_to_vmem [thread:$0]  %s0, 128, %s17, [#allocation3]
    $region5: #{tpu_custom_call.1} parent=1 // pred_fallthru
      _
    // Predicated region
    $region6: #{tpu_custom_call.1} parent=1 // pred_check
      _
    $region7: #{tpu_custom_call.1} parent=1 // pred_check_branch
      %21 = sbr.rel (0) target = $region9
    $region8: #{tpu_custom_call.1} parent=1 // pred_region
      %s23 = ssub.s32 128, 128
      %24 = vsyncadd [#allocation5], %s23
      %s26 = sshll.u32 [#allocation4], 4
      %s27 = int_to_ptr.vmem [resolvable:$true] %s26
      %29 = dma.hbm_to_vmem [thread:$0]  %s1, 128, %s27, [#allocation5]
    $region9: #{tpu_custom_call.1} parent=1 // pred_fallthru
      _
    // Predicated region
    $region10: #{tpu_custom_call.1} parent=1 // pred_check
      _
    $region11: #{tpu_custom_call.1} parent=1 // pred_check_branch
      %31 = sbr.rel (0) target = $region13
    $region12: #{tpu_custom_call.1} parent=1 // pred_region
      %s33 = ssub.s32 128, 128
      %34 = vsyncadd [#allocation5], %s33
      %s36 = sshll.u32 [#allocation6], 4
      %s37 = int_to_ptr.vmem [resolvable:$true] %s36
      %39 = dma.hbm_to_vmem [thread:$0]  %s2, 128, %s37, [#allocation5]
    $region13: #{tpu_custom_call.1} parent=1 // pred_fallthru
      _
    // Predicated region
    $region14: #{tpu_custom_call.1} parent=1 // pred_check
      _
    $region15: #{tpu_custom_call.1} parent=1 // pred_check_branch
      %41 = sbr.rel (0) target = $region17
    $region16: #{tpu_custom_call.1} parent=1 // pred_region
      %42 = dma.done [#allocation3], 128
    $region17: #{tpu_custom_call.1} parent=1 // pred_fallthru
      _
    // Predicated region
    $region18: #{tpu_custom_call.1} parent=1 // pred_check
      _
    $region19: #{tpu_custom_call.1} parent=1 // pred_check_branch
      %44 = sbr.rel (0) target = $region21
    $region20: #{tpu_custom_call.1} parent=1 // pred_region
      %45 = dma.done [#allocation5], 128
    $region21: #{tpu_custom_call.1} parent=1 // pred_fallthru
      _
    // Predicated region
    $region22: #{tpu_custom_call.1} parent=1 // pred_check
      _
    $region23: #{tpu_custom_call.1} parent=1 // pred_check_branch
      %47 = sbr.rel (0) target = $region25
    $region24: #{tpu_custom_call.1} parent=1 // pred_region
      %48 = dma.done [#allocation5], 128
    $region25: #{tpu_custom_call.1} parent=1 // pred_fallthru
      _
    %v49 = vld [vmem:[#allocation2] sm:$0xff]
    %v50 = vld [vmem:[#allocation4] sm:$0xff]
    %v51 = vld [vmem:[#allocation6] sm:$0xff]
    %v52 = vsub.f32 %v49, %v50
    %v53 = vsub.f32 %v49, %v51
    %v54 = vmul.f32 %v52, %v52
    %v55 = vmul.f32 %v53, %v53
    %v56 = vsub.f32 %v54, %v55
    %vm57 = vcmask 261120
    %v58 = vsel %vm57, %v56, 0.0
    %59 = vadd.xlane.f32.xlu0 %v58
    %v60 = vpop.xlane.xlu0 %59
    %v61 = vadd.f32 %v60, 1.0
    %v62 = vmax.f32 %v61, 0.0
    %s63 = smul.u32 0, 8
    %v64 = vlaneseq
    %v65 = vshrl.u32 %v64, 7
    %v66 = vstv %s63
    %v67 = vadd.s32 %v66, %v65
    %vm68 = vcmp.lt.s32.totalorder %v67, 8
    %v69 = vsel %vm68, %v62, 0.0
    %vm70 = vcmask 7168
    %71 = vst.msk [vmem:[%s3] sm:$0xff] %vm70, %v69
    // Predicated region
    $region26: #{tpu_custom_call.1} parent=1 // pred_check
      _
    $region27: #{tpu_custom_call.1} parent=1 // pred_check_branch
      %73 = sbr.rel (0) target = $region29
    $region28: #{tpu_custom_call.1} parent=1 // pred_region
      _
    $region29: #{tpu_custom_call.1} parent=1 // pred_fallthru
      _
    // Predicated region
    $region30: #{tpu_custom_call.1} parent=1 // pred_check
      _
    $region31: #{tpu_custom_call.1} parent=1 // pred_check_branch
      %75 = sbr.rel (0) target = $region33
    $region32: #{tpu_custom_call.1} parent=1 // pred_region
      _
    $region33: #{tpu_custom_call.1} parent=1 // pred_fallthru
      _
    %76 = vsyncpa [#allocation3], 1
    %77 = vsyncpa [#allocation5], 1

</llo_original>
